<compile_context>
chip_gen: v6e
topology: v6e:2x2x1
jax: 0.10.0
libtpu: 0.0.40
codegen_flags: <defaults>
</compile_context>

<pallas_src>
import math

import jax
import jax.numpy as jnp
from jax.experimental import pallas as pl
from jax.experimental.pallas import tpu as pltpu

LANE = 128
SUBLANE = 8


def _round_up(n, m):
    return (n + m - 1) // m * m


def _recip(x):
    # approx reciprocal on the EUP + one Newton-Raphson step on the VPU ->
    # ~f32-accurate at trivial cost.
    r = pl.reciprocal(x, approx=True)
    return r * (2.0 - x * r)


def _fast_mish(x):
    # mish(x) = x * tanh(softplus(x)) = x * (w - 1) / (w + 1),  w = (1 + exp(x))^2.
    # Clamp the exp input at 20 so it never overflows in f32; for x > 20 the
    # ratio (w-1)/(w+1) rounds to 1.0, so no extra guard/select is needed.
    xs = jnp.minimum(x, 20.0)
    w = 1.0 + jnp.exp(xs)
    w = w * w
    return x * (w - 1.0) * _recip(w + 1.0)


def _dnn_kernel(x_ref,
                w1_ref, b1_ref,
                w2_ref, b2_ref,
                w3_ref, b3_ref,
                out_ref):
    x = x_ref[...]                                                  # (TB, in_size) f32

    # fc1 + mish       (dropout1 = identity in eval mode); bf16 MXU, f32 accumulate.
    h = jnp.dot(x.astype(jnp.bfloat16), w1_ref[...],
                preferred_element_type=jnp.float32) + b1_ref[...]
    h = _fast_mish(h)

    # bn1 folded into fc2 weights/bias on the host; fc2 + mish (dropout2 identity).
    h = jnp.dot(h.astype(jnp.bfloat16), w2_ref[...],
                preferred_element_type=jnp.float32) + b2_ref[...]
    h = _fast_mish(h)

    # bn2 folded into fc3 weights/bias; fc3 + mish.  w3 has exactly output_size
    # columns, so there are no padded logit lanes and no masking is required.
    h = jnp.dot(h.astype(jnp.bfloat16), w3_ref[...],
                preferred_element_type=jnp.float32) + b3_ref[...]
    h = _fast_mish(h)

    # Row softmax over the (unpadded) feature axis.
    m = jnp.max(h, axis=1, keepdims=True)
    e = jnp.exp(h - m)
    s = jnp.sum(e, axis=1, keepdims=True)
    out_ref[...] = e * _recip(s)


def deep_nn_forward(x, kparams, *, tb=2048):
    """x: (B, input_size) float32. Returns (B, output_size) softmax probs."""
    B, in_size = x.shape
    out_size = kparams["w3"].shape[1]

    # Batch tile: 8-sublane aligned, clamped to the batch.  Additionally cap it
    # at ceil(B/2) (8-aligned) so the "parallel" grid has >= 2 steps and both
    # v7x TensorCores participate; neutral on single-TC v5e/v6e.
    tb = min(tb, _round_up(B, SUBLANE))
    tb = max(SUBLANE, min(tb, _round_up(-(-B // 2), SUBLANE)))
    grid = (pl.cdiv(B, tb),)

    def resident(arr):  # full-array spec, constant index_map -> stays in VMEM
        return pl.BlockSpec(arr.shape, lambda i: (0, 0))

    args = (x,
            kparams["w1"], kparams["b1"],
            kparams["w2"], kparams["b2"],
            kparams["w3"], kparams["b3"])

    # NOTE: the last grid step may be a partial block; its padded rows contain
    # unspecified data and may produce inf/NaN in their (discarded) output rows.
    # That is safe only because every op here is row-independent -- do NOT add
    # cross-row reductions to this kernel.
    return pl.pallas_call(
        _dnn_kernel,
        out_shape=jax.ShapeDtypeStruct((B, out_size), jnp.float32),
        grid=grid,
        in_specs=[pl.BlockSpec((tb, in_size), lambda i: (i, 0))]
                 + [resident(a) for a in args[1:]],
        out_specs=pl.BlockSpec((tb, out_size), lambda i: (i, 0)),
        compiler_params=pltpu.CompilerParams(
            dimension_semantics=("parallel",)),
    )(*args)


def make_logical_params(key, input_size, output_size):
    """PyTorch-style init at the logical (unpadded, unfolded) shapes."""
    closest_pow2 = 2 ** int(math.floor(math.log(input_size, 2)))
    hidden2 = closest_pow2 // 2
    keys = jax.random.split(key, 6)

    def linear_init(kw, kb, fan_in, fan_out):
        bound = 1.0 / math.sqrt(fan_in)
        # stored pre-transposed: (in, out) so the kernel does x @ W
        w = jax.random.uniform(kw, (fan_in, fan_out), jnp.float32, -bound, bound)
        b = jax.random.uniform(kb, (fan_out,), jnp.float32, -bound, bound)
        return w, b

    w1, b1 = linear_init(keys[0], keys[1], input_size, closest_pow2)
    w2, b2 = linear_init(keys[2], keys[3], closest_pow2, hidden2)
    w3, b3 = linear_init(keys[4], keys[5], hidden2, output_size)

    # BatchNorm1d eval mode, default params: gamma=1, beta=0, mean=0, var=1
    eps = 1e-5
    s1 = jnp.full((closest_pow2,), 1.0 / math.sqrt(1.0 + eps), jnp.float32)
    t1 = jnp.zeros((closest_pow2,), jnp.float32)
    s2 = jnp.full((hidden2,), 1.0 / math.sqrt(1.0 + eps), jnp.float32)
    t2 = jnp.zeros((hidden2,), jnp.float32)

    return dict(w1=w1, b1=b1, s1=s1, t1=t1,
                w2=w2, b2=b2, s2=s2, t2=t2,
                w3=w3, b3=b3,
                input_size=input_size, output_size=output_size)


def prepare_kernel_params(lp):
    """Fold BN affines into the following Linear; pad hidden dims to 128 lanes.

    The first matmul's K dim (input_size) and the last matmul's N dim
    (output_size) are kept at their true sizes so the kernel's HBM input/output
    traffic carries no padding.  Weights are bf16 (MXU operands); biases stay
    f32 (VPU adds).
    """
    input_size = lp["input_size"]
    output_size = lp["output_size"]

    # (h * s + t) @ W + b  ==  h @ (s[:, None] * W) + (t @ W + b)
    w2f = lp["s1"][:, None] * lp["w2"]
    b2f = lp["t1"] @ lp["w2"] + lp["b2"]
    w3f = lp["s2"][:, None] * lp["w3"]
    b3f = lp["t2"] @ lp["w3"] + lp["b3"]

    h1_p = _round_up(lp["w1"].shape[1], LANE)
    h2_p = _round_up(lp["w2"].shape[1], LANE)

    def pad2(w, r, c):
        out = jnp.zeros((r, c), jnp.bfloat16)
        return out.at[:w.shape[0], :w.shape[1]].set(w.astype(jnp.bfloat16))

    def pad1(b, c):
        return jnp.zeros((1, c), jnp.float32).at[0, :b.shape[0]].set(b)

    return dict(
        w1=pad2(lp["w1"], input_size, h1_p), b1=pad1(lp["b1"], h1_p),
        w2=pad2(w2f, h1_p, h2_p),            b2=pad1(b2f, h2_p),
        w3=pad2(w3f, h2_p, output_size),     b3=pad1(b3f, output_size),
    )


def reference_forward(x, lp):
    """Pure-JAX f32 eval-mode reference matching the PyTorch forward."""
    mish = lambda v: v * jnp.tanh(jax.nn.softplus(v))
    h = mish(x @ lp["w1"] + lp["b1"])          # fc1 + mish (+ dropout1 identity)
    h = h * lp["s1"] + lp["t1"]                # bn1
    h = mish(h @ lp["w2"] + lp["b2"])          # fc2 + mish (+ dropout2 identity)
    h = h * lp["s2"] + lp["t2"]                # bn2
    h = mish(h @ lp["w3"] + lp["b3"])          # fc3 + mish
    return jax.nn.softmax(h, axis=1)


if __name__ == "__main__":
    key = jax.random.PRNGKey(0)
    B, input_size, output_size = 8, 48, 10     # closest_pow2 = 32, hidden2 = 16

    pkey, xkey = jax.random.split(key)
    lp = make_logical_params(pkey, input_size, output_size)
    kp = prepare_kernel_params(lp)
    x = jax.random.normal(xkey, (B, input_size), jnp.float32)

    out = deep_nn_forward(x, kp)
    out = jax.block_until_ready(out)

    ref = reference_forward(x, lp)

    assert out.shape == (B, output_size)
    assert bool(jnp.all(jnp.isfinite(out)))
    # Newton-refined reciprocal -> rows sum to 1 at near-f32 precision.
    assert bool(jnp.allclose(jnp.sum(out, axis=1), 1.0, atol=1e-4))
    # bf16 matmul operands vs f32 reference -> slightly looser tolerance.
    assert bool(jnp.allclose(out, ref, rtol=2e-2, atol=1e-2))
    print("KERNEL_OK")
</pallas_src>

<mosaic_0001>
module attributes {stable_mosaic.version = 11 : i64} {
  func.func @_dnn_kernel(%arg0: i32, %arg1: memref<8x48xf32, #tpu.memory_space<vmem>>, %arg2: memref<48x128xbf16, #tpu.memory_space<vmem>>, %arg3: memref<1x128xf32, #tpu.memory_space<vmem>>, %arg4: memref<128x128xbf16, #tpu.memory_space<vmem>>, %arg5: memref<1x128xf32, #tpu.memory_space<vmem>>, %arg6: memref<128x10xbf16, #tpu.memory_space<vmem>>, %arg7: memref<1x10xf32, #tpu.memory_space<vmem>>, %arg8: memref<8x10xf32, #tpu.memory_space<vmem>>) attributes {dimension_semantics = [#tpu.dimension_semantics<parallel>], iteration_bounds = array<i64: 1>, scalar_prefetch = 0 : i64, scratch_operands = 0 : i64, tpu.core_type = #tpu.core_type<tc>, window_params = [{transform_indices = @transform_0, window_bounds = array<i64: 8, 48>}, {pipeline_mode = #tpu.pipeline_mode<synchronous>, transform_indices = @transform_1, window_bounds = array<i64: 48, 128>}, {pipeline_mode = #tpu.pipeline_mode<synchronous>, transform_indices = @transform_2, window_bounds = array<i64: 1, 128>}, {pipeline_mode = #tpu.pipeline_mode<synchronous>, transform_indices = @transform_3, window_bounds = array<i64: 128, 128>}, {pipeline_mode = #tpu.pipeline_mode<synchronous>, transform_indices = @transform_4, window_bounds = array<i64: 1, 128>}, {pipeline_mode = #tpu.pipeline_mode<synchronous>, transform_indices = @transform_5, window_bounds = array<i64: 128, 10>}, {pipeline_mode = #tpu.pipeline_mode<synchronous>, transform_indices = @transform_6, window_bounds = array<i64: 1, 10>}, {transform_indices = @transform_7, window_bounds = array<i64: 8, 10>}]} {
    %c0 = arith.constant 0 : index
    %c0_0 = arith.constant 0 : index
    %0 = vector.load %arg1[%c0, %c0_0] : memref<8x48xf32, #tpu.memory_space<vmem>>, vector<8x48xf32>
    %1 = arith.truncf %0 : vector<8x48xf32> to vector<8x48xbf16>
    %c0_1 = arith.constant 0 : index
    %c0_2 = arith.constant 0 : index
    %2 = vector.load %arg2[%c0_1, %c0_2] : memref<48x128xbf16, #tpu.memory_space<vmem>>, vector<48x128xbf16>
    %cst = arith.constant dense<0.000000e+00> : vector<8x128xf32>
    %3 = tpu.matmul %1, %2, %cst {dimension_numbers = #tpu.dot_dimension_numbers<[1], [0], [0], [1], [0, 0, 1, 1], [], []>} : vector<8x48xbf16>, vector<48x128xbf16>, vector<8x128xf32> -> vector<8x128xf32>
    %c0_3 = arith.constant 0 : index
    %c0_4 = arith.constant 0 : index
    %4 = vector.load %arg3[%c0_3, %c0_4] : memref<1x128xf32, #tpu.memory_space<vmem>>, vector<1x128xf32>
    %5 = vector.broadcast %4 : vector<1x128xf32> to vector<8x128xf32>
    %6 = arith.addf %3, %5 : vector<8x128xf32>
    %cst_5 = arith.constant 2.000000e+01 : f32
    %7 = vector.broadcast %cst_5 : f32 to vector<8x128xf32>
    %8 = arith.minimumf %6, %7 : vector<8x128xf32>
    %9 = math.exp %8 : vector<8x128xf32>
    %cst_6 = arith.constant 1.000000e+00 : f32
    %10 = vector.broadcast %cst_6 : f32 to vector<8x128xf32>
    %11 = arith.addf %10, %9 : vector<8x128xf32>
    %12 = arith.mulf %11, %11 : vector<8x128xf32>
    %cst_7 = arith.constant 1.000000e+00 : f32
    %13 = vector.broadcast %cst_7 : f32 to vector<8x128xf32>
    %14 = arith.subf %12, %13 : vector<8x128xf32>
    %15 = arith.mulf %6, %14 : vector<8x128xf32>
    %cst_8 = arith.constant 1.000000e+00 : f32
    %16 = vector.broadcast %cst_8 : f32 to vector<8x128xf32>
    %17 = arith.addf %12, %16 : vector<8x128xf32>
    %18 = tpu.reciprocal %17 {approx = true} : vector<8x128xf32> -> vector<8x128xf32>
    %19 = arith.mulf %17, %18 : vector<8x128xf32>
    %cst_9 = arith.constant 2.000000e+00 : f32
    %20 = vector.broadcast %cst_9 : f32 to vector<8x128xf32>
    %21 = arith.subf %20, %19 : vector<8x128xf32>
    %22 = arith.mulf %18, %21 : vector<8x128xf32>
    %23 = arith.mulf %15, %22 : vector<8x128xf32>
    %24 = arith.truncf %23 : vector<8x128xf32> to vector<8x128xbf16>
    %c0_10 = arith.constant 0 : index
    %c0_11 = arith.constant 0 : index
    %25 = vector.load %arg4[%c0_10, %c0_11] : memref<128x128xbf16, #tpu.memory_space<vmem>>, vector<128x128xbf16>
    %cst_12 = arith.constant dense<0.000000e+00> : vector<8x128xf32>
    %26 = tpu.matmul %24, %25, %cst_12 {dimension_numbers = #tpu.dot_dimension_numbers<[1], [0], [0], [1], [0, 0, 1, 1], [], []>} : vector<8x128xbf16>, vector<128x128xbf16>, vector<8x128xf32> -> vector<8x128xf32>
    %c0_13 = arith.constant 0 : index
    %c0_14 = arith.constant 0 : index
    %27 = vector.load %arg5[%c0_13, %c0_14] : memref<1x128xf32, #tpu.memory_space<vmem>>, vector<1x128xf32>
    %28 = vector.broadcast %27 : vector<1x128xf32> to vector<8x128xf32>
    %29 = arith.addf %26, %28 : vector<8x128xf32>
    %cst_15 = arith.constant 2.000000e+01 : f32
    %30 = vector.broadcast %cst_15 : f32 to vector<8x128xf32>
    %31 = arith.minimumf %29, %30 : vector<8x128xf32>
    %32 = math.exp %31 : vector<8x128xf32>
    %cst_16 = arith.constant 1.000000e+00 : f32
    %33 = vector.broadcast %cst_16 : f32 to vector<8x128xf32>
    %34 = arith.addf %33, %32 : vector<8x128xf32>
    %35 = arith.mulf %34, %34 : vector<8x128xf32>
    %cst_17 = arith.constant 1.000000e+00 : f32
    %36 = vector.broadcast %cst_17 : f32 to vector<8x128xf32>
    %37 = arith.subf %35, %36 : vector<8x128xf32>
    %38 = arith.mulf %29, %37 : vector<8x128xf32>
    %cst_18 = arith.constant 1.000000e+00 : f32
    %39 = vector.broadcast %cst_18 : f32 to vector<8x128xf32>
    %40 = arith.addf %35, %39 : vector<8x128xf32>
    %41 = tpu.reciprocal %40 {approx = true} : vector<8x128xf32> -> vector<8x128xf32>
    %42 = arith.mulf %40, %41 : vector<8x128xf32>
    %cst_19 = arith.constant 2.000000e+00 : f32
    %43 = vector.broadcast %cst_19 : f32 to vector<8x128xf32>
    %44 = arith.subf %43, %42 : vector<8x128xf32>
    %45 = arith.mulf %41, %44 : vector<8x128xf32>
    %46 = arith.mulf %38, %45 : vector<8x128xf32>
    %47 = arith.truncf %46 : vector<8x128xf32> to vector<8x128xbf16>
    %c0_20 = arith.constant 0 : index
    %c0_21 = arith.constant 0 : index
    %48 = vector.load %arg6[%c0_20, %c0_21] : memref<128x10xbf16, #tpu.memory_space<vmem>>, vector<128x10xbf16>
    %cst_22 = arith.constant dense<0.000000e+00> : vector<8x10xf32>
    %49 = tpu.matmul %47, %48, %cst_22 {dimension_numbers = #tpu.dot_dimension_numbers<[1], [0], [0], [1], [0, 0, 1, 1], [], []>} : vector<8x128xbf16>, vector<128x10xbf16>, vector<8x10xf32> -> vector<8x10xf32>
    %c0_23 = arith.constant 0 : index
    %c0_24 = arith.constant 0 : index
    %50 = vector.load %arg7[%c0_23, %c0_24] : memref<1x10xf32, #tpu.memory_space<vmem>>, vector<1x10xf32>
    %51 = vector.broadcast %50 : vector<1x10xf32> to vector<8x10xf32>
    %52 = arith.addf %49, %51 : vector<8x10xf32>
    %cst_25 = arith.constant 2.000000e+01 : f32
    %53 = vector.broadcast %cst_25 : f32 to vector<8x10xf32>
    %54 = arith.minimumf %52, %53 : vector<8x10xf32>
    %55 = math.exp %54 : vector<8x10xf32>
    %cst_26 = arith.constant 1.000000e+00 : f32
    %56 = vector.broadcast %cst_26 : f32 to vector<8x10xf32>
    %57 = arith.addf %56, %55 : vector<8x10xf32>
    %58 = arith.mulf %57, %57 : vector<8x10xf32>
    %cst_27 = arith.constant 1.000000e+00 : f32
    %59 = vector.broadcast %cst_27 : f32 to vector<8x10xf32>
    %60 = arith.subf %58, %59 : vector<8x10xf32>
    %61 = arith.mulf %52, %60 : vector<8x10xf32>
    %cst_28 = arith.constant 1.000000e+00 : f32
    %62 = vector.broadcast %cst_28 : f32 to vector<8x10xf32>
    %63 = arith.addf %58, %62 : vector<8x10xf32>
    %64 = tpu.reciprocal %63 {approx = true} : vector<8x10xf32> -> vector<8x10xf32>
    %65 = arith.mulf %63, %64 : vector<8x10xf32>
    %cst_29 = arith.constant 2.000000e+00 : f32
    %66 = vector.broadcast %cst_29 : f32 to vector<8x10xf32>
    %67 = arith.subf %66, %65 : vector<8x10xf32>
    %68 = arith.mulf %64, %67 : vector<8x10xf32>
    %69 = arith.mulf %61, %68 : vector<8x10xf32>
    %cst_30 = arith.constant dense<0xFF800000> : vector<8xf32>
    %70 = vector.multi_reduction <maximumf>, %69, %cst_30 [1] : vector<8x10xf32> to vector<8xf32>
    %71 = vector.shape_cast %70 : vector<8xf32> to vector<8x1xf32>
    %72 = vector.broadcast %71 : vector<8x1xf32> to vector<8x10xf32>
    %73 = arith.subf %69, %72 : vector<8x10xf32>
    %74 = math.exp %73 : vector<8x10xf32>
    %cst_31 = arith.constant dense<0.000000e+00> : vector<8xf32>
    %75 = vector.multi_reduction <add>, %74, %cst_31 [1] : vector<8x10xf32> to vector<8xf32>
    %76 = vector.shape_cast %75 : vector<8xf32> to vector<8x1xf32>
    %77 = tpu.reciprocal %76 {approx = true} : vector<8x1xf32> -> vector<8x1xf32>
    %78 = arith.mulf %76, %77 : vector<8x1xf32>
    %cst_32 = arith.constant 2.000000e+00 : f32
    %79 = vector.broadcast %cst_32 : f32 to vector<8x1xf32>
    %80 = arith.subf %79, %78 : vector<8x1xf32>
    %81 = arith.mulf %77, %80 : vector<8x1xf32>
    %82 = vector.broadcast %81 : vector<8x1xf32> to vector<8x10xf32>
    %83 = arith.mulf %74, %82 : vector<8x10xf32>
    %c0_33 = arith.constant 0 : index
    %c0_34 = arith.constant 0 : index
    %84 = vector.load %arg8[%c0_33, %c0_34] : memref<8x10xf32, #tpu.memory_space<vmem>>, vector<8x10xf32>
    tpu.vector_store %arg8[%c0_33, %c0_34], %83 {strides = array<i32>} : memref<8x10xf32, #tpu.memory_space<vmem>>, vector<8x10xf32>,
    return
  }
  func.func @transform_0(%arg0: i32) -> (i32, i32) {
    %c0_i32 = arith.constant 0 : i32
    %c0_i32_0 = arith.constant 0 : i32
    return %arg0, %c0_i32 : i32, i32
  }
  func.func @transform_1(%arg0: i32) -> (i32, i32) {
    %c0_i32 = arith.constant 0 : i32
    %c0_i32_0 = arith.constant 0 : i32
    %c0_i32_1 = arith.constant 0 : i32
    return %c0_i32, %c0_i32_0 : i32, i32
  }
  func.func @transform_2(%arg0: i32) -> (i32, i32) {
    %c0_i32 = arith.constant 0 : i32
    %c0_i32_0 = arith.constant 0 : i32
    %c0_i32_1 = arith.constant 0 : i32
    return %c0_i32, %c0_i32_0 : i32, i32
  }
  func.func @transform_3(%arg0: i32) -> (i32, i32) {
    %c0_i32 = arith.constant 0 : i32
    %c0_i32_0 = arith.constant 0 : i32
    %c0_i32_1 = arith.constant 0 : i32
    return %c0_i32, %c0_i32_0 : i32, i32
  }
  func.func @transform_4(%arg0: i32) -> (i32, i32) {
    %c0_i32 = arith.constant 0 : i32
    %c0_i32_0 = arith.constant 0 : i32
    %c0_i32_1 = arith.constant 0 : i32
    return %c0_i32, %c0_i32_0 : i32, i32
  }
  func.func @transform_5(%arg0: i32) -> (i32, i32) {
    %c0_i32 = arith.constant 0 : i32
    %c0_i32_0 = arith.constant 0 : i32
    %c0_i32_1 = arith.constant 0 : i32
    return %c0_i32, %c0_i32_0 : i32, i32
  }
  func.func @transform_6(%arg0: i32) -> (i32, i32) {
    %c0_i32 = arith.constant 0 : i32
    %c0_i32_0 = arith.constant 0 : i32
    %c0_i32_1 = arith.constant 0 : i32
    return %c0_i32, %c0_i32_0 : i32, i32
  }
  func.func @transform_7(%arg0: i32) -> (i32, i32) {
    %c0_i32 = arith.constant 0 : i32
    %c0_i32_0 = arith.constant 0 : i32
    return %arg0, %c0_i32 : i32, i32
  }
}

</mosaic_0001>

<llo_original>
// kernel: tpu_custom_call.1
$region0: #{tpu_custom_call.1}
  #allocation0 [shape = 'u32[]', space=smem, size = 0x4, offset = 0x4, fixed_abs, tag = 'smem constant byte address 0x4 - core index']
  #allocation1 [shape = 'u32[144,128]{1,0:T(1,128)}', space=vmem, size = 0x12000, scoped, tag = 'internal scratch']
  %s0 = inlined_call_operand.vmem [shape: f32[8,48], index: 0, kind: input, shape index: {}]
  %s1 = inlined_call_operand.hbm [shape: bf16[48,128], index: 1, kind: input, shape index: {}]
  %s2 = inlined_call_operand.vmem [shape: f32[1,128], index: 2, kind: input, shape index: {}]
  %s3 = inlined_call_operand.vmem [shape: bf16[128,128], index: 3, kind: input, shape index: {}]
  %s4 = inlined_call_operand.hbm [shape: f32[1,128], index: 4, kind: input, shape index: {}]
  %s5 = inlined_call_operand.vmem [shape: bf16[128,10], index: 5, kind: input, shape index: {}]
  %s6 = inlined_call_operand.vmem [shape: f32[1,10], index: 6, kind: input, shape index: {}]
  %s7 = inlined_call_operand.hbm [shape: f32[8,10], index: 7, kind: output, shape index: {}]
  %s8 = sld [smem:[#allocation0]]
  $region46: #{tpu_custom_call.1} parent=0
    _
  %s10 = ssub.s32 1, %s8
  %s11 = scalar_select 0, %s10, %s8
  $region1: #{tpu_custom_call.1} parent=0
    #allocation2 [shape = 'u8[12288]{0}', space=vmem, size = 0x3000, scoped, tag = 'input window, operand 1, single buffered']
    #allocation3 [shape = 's32[1]{0}', space=sflag, size = 0x4, scoped, tag = 'scoped memory for tpu_custom_call.1']
    #allocation4 [shape = 's32[1]{0}', space=sflag, size = 0x4, scoped, tag = 'scoped memory for tpu_custom_call.1']
    #allocation5 [shape = 'u8[512]{0}', space=vmem, size = 0x400, scoped, tag = 'input window, operand 4, single buffered']
    #allocation6 [shape = 's32[1]{0}', space=sflag, size = 0x4, scoped, tag = 'scoped memory for tpu_custom_call.1']
    #allocation7 [shape = 'u8[4096]{0}', space=vmem, size = 0x1000, scoped, tag = 'output window, operand 0, single buffered']
    %12 = vsyncpa [#allocation3], 0
    %13 = vsyncpa [#allocation6], 0
    %14 = vsyncpa [#allocation4], 0
    // Predicated region
    $region2: #{tpu_custom_call.1} parent=1 // pred_check
      _
    $region3: #{tpu_custom_call.1} parent=1 // pred_check_branch
      %16 = sbr.rel (0) target = $region5
    $region4: #{tpu_custom_call.1} parent=1 // pred_region
      _
    $region5: #{tpu_custom_call.1} parent=1 // pred_fallthru
      _
    // Predicated region
    $region6: #{tpu_custom_call.1} parent=1 // pred_check
      _
    $region7: #{tpu_custom_call.1} parent=1 // pred_check_branch
      %18 = sbr.rel (0) target = $region9
    $region8: #{tpu_custom_call.1} parent=1 // pred_region
      %s20 = ssub.s32 384, 384
      %21 = vsyncadd [#allocation3], %s20
      %s22 = sshll.u32 [#allocation2], 4
      %s23 = int_to_ptr.vmem [resolvable:$true] %s22
      %28 = dma.hbm_to_vmem [thread:$0]  %s1, 384, %s23, [#allocation3], 64, 64, 4
    $region9: #{tpu_custom_call.1} parent=1 // pred_fallthru
      _
    // Predicated region
    $region10: #{tpu_custom_call.1} parent=1 // pred_check
      _
    $region11: #{tpu_custom_call.1} parent=1 // pred_check_branch
      %30 = sbr.rel (0) target = $region13
    $region12: #{tpu_custom_call.1} parent=1 // pred_region
      _
    $region13: #{tpu_custom_call.1} parent=1 // pred_fallthru
      _
    // Predicated region
    $region14: #{tpu_custom_call.1} parent=1 // pred_check
      _
    $region15: #{tpu_custom_call.1} parent=1 // pred_check_branch
      %32 = sbr.rel (0) target = $region17
    $region16: #{tpu_custom_call.1} parent=1 // pred_region
      _
    $region17: #{tpu_custom_call.1} parent=1 // pred_fallthru
      _
    // Predicated region
    $region18: #{tpu_custom_call.1} parent=1 // pred_check
      _
    $region19: #{tpu_custom_call.1} parent=1 // pred_check_branch
      %34 = sbr.rel (0) target = $region21
    $region20: #{tpu_custom_call.1} parent=1 // pred_region
      %s36 = ssub.s32 16, 16
      %37 = vsyncadd [#allocation6], %s36
      %s39 = sshll.u32 [#allocation5], 4
      %s40 = int_to_ptr.vmem [resolvable:$true] %s39
      %42 = dma.hbm_to_vmem [thread:$0]  %s4, 16, %s40, [#allocation6]
    $region21: #{tpu_custom_call.1} parent=1 // pred_fallthru
      _
    // Predicated region
    $region22: #{tpu_custom_call.1} parent=1 // pred_check
      _
    $region23: #{tpu_custom_call.1} parent=1 // pred_check_branch
      %44 = sbr.rel (0) target = $region25
    $region24: #{tpu_custom_call.1} parent=1 // pred_region
      _
    $region25: #{tpu_custom_call.1} parent=1 // pred_fallthru
      _
    // Predicated region
    $region26: #{tpu_custom_call.1} parent=1 // pred_check
      _
    $region27: #{tpu_custom_call.1} parent=1 // pred_check_branch
      %46 = sbr.rel (0) target = $region29
    $region28: #{tpu_custom_call.1} parent=1 // pred_region
      _
    $region29: #{tpu_custom_call.1} parent=1 // pred_fallthru
      _
    // Predicated region
    $region30: #{tpu_custom_call.1} parent=1 // pred_check
      _
    $region31: #{tpu_custom_call.1} parent=1 // pred_check_branch
      %48 = sbr.rel (0) target = $region33
    $region32: #{tpu_custom_call.1} parent=1 // pred_region
      %49 = dma.done [#allocation3], 384
    $region33: #{tpu_custom_call.1} parent=1 // pred_fallthru
      _
    // Predicated region
    $region34: #{tpu_custom_call.1} parent=1 // pred_check
      _
    $region35: #{tpu_custom_call.1} parent=1 // pred_check_branch
      %51 = sbr.rel (0) target = $region37
    $region36: #{tpu_custom_call.1} parent=1 // pred_region
      %52 = dma.done [#allocation6], 16
    $region37: #{tpu_custom_call.1} parent=1 // pred_fallthru
      _
    %v54 = vld [vmem:[%s0] sm:$0xff]
    %v55 = vpack.c.bf16 %v54, %v54
    %v56 = vld [vmem:[#allocation2] sm:$0xf]
    %v57 = vld [vmem:[#allocation2 + $0x4] sm:$0xf]
    %v58 = vld [vmem:[#allocation2 + $0x8] sm:$0xf]
    %v59 = vld [vmem:[#allocation2 + $0xc] sm:$0xf]
    %v60 = vld [vmem:[#allocation2 + $0x10] sm:$0xf]
    %v61 = vld [vmem:[#allocation2 + $0x14] sm:$0xf]
    %v62 = vld [vmem:[%s2] sm:$0x1]
    %v64 = vlaneseq
    %v65 = vshrl.u32 %v64, 7
    %v66 = vsub.s32 0, %v65
    %v67 = vrot.slane %v62, %v66
    %v75 = vunpack.c.l.b16 %v56
    %v76 = vunpack.c.l.b16 %v57
    %v77 = vunpack.c.l.b16 %v58
    %v78 = vunpack.c.l.b16 %v59
    %v79 = vunpack.c.l.b16 %v60
    %v80 = vunpack.c.l.b16 %v61
    %v81 = vpack.c.b16 %v76, %v75
    %v82 = vpack.c.b16 %v78, %v77
    %v83 = vpack.c.b16 %v80, %v79
    %vm87 = vcmask 392192
    %v89 = vsel %vm87, %v55, 0
    %91 = vmatprep.subr.bf16.mxu0 0
    %92 = vmatpush1.bf16.msra.mxu0 0
    %93 = vmatprep.subr.bf16.mxu0 0
    %94 = vmatpush1.bf16.msra.mxu0 0
    %95 = vmatprep.subr.bf16.mxu0 0
    %96 = vmatpush1.bf16.msra.mxu0 0
    %97 = vmatprep.subr.bf16.mxu0 0
    %98 = vmatpush1.bf16.msra.mxu0 0
    %99 = vmatprep.subr.bf16.mxu0 0
    %100 = vmatpush1.bf16.msra.mxu0 0
    %101 = vmatprep.subr.bf16.mxu0 0
    %102 = vmatpush1.bf16.msra.mxu0 %v83
    %103 = vmatprep.subr.bf16.mxu0 0
    %104 = vmatpush1.bf16.msra.mxu0 %v82
    %105 = vmatprep.subr.bf16.mxu0 0
    %106 = vmatpush1.bf16.msra.mxu0 %v81
    %107 = vmatprep.subr.bf16.mxu0 0
    %108 = vmatpush2.bf16.msra.mxu0 0
    %109 = vmatprep.subr.bf16.mxu0 0
    %110 = vmatpush2.bf16.msra.mxu0 0
    %111 = vmatprep.subr.bf16.mxu0 0
    %112 = vmatpush2.bf16.msra.mxu0 0
    %113 = vmatprep.subr.bf16.mxu0 0
    %114 = vmatpush2.bf16.msra.mxu0 0
    %115 = vmatprep.subr.bf16.mxu0 0
    %116 = vmatpush2.bf16.msra.mxu0 0
    %117 = vmatprep.subr.bf16.mxu0 0
    %118 = vmatpush2.bf16.msra.mxu0 0
    %119 = vmatprep.subr.bf16.mxu0 0
    %120 = vmatpush2.bf16.msra.mxu0 0
    %121 = vmatprep.subr.bf16.mxu0 0
    %122 = vmatpush2.bf16.msra.mxu0 0
    %123 = vmatprep.mubr.bf16.mxu0 0
    %124 = vmatmul.mubr.bf16.gmra.mxu0 %v89
    %v125 = vpop.f32.mrf.mxu0
    %v126 = vadd.f32 %v67, %v125
    %v127 = vpop.f32.mrf.mxu0
    %v128 = vpop.f32.mrf.mxu0
    %v129 = vpop.f32.mrf.mxu0
    %130 = vdwg.mxu0
    %v131 = vmin.f32 %v126, 20.0
    %v132 = vmul.f32 %v131, 1.442695
    %v133 = vpow.pop %v132
    %v134 = vadd.f32 %v133, 1.0
    %v135 = vmul.f32 %v134, %v134
    %v136 = vsub.f32 %v135, 1.0
    %v137 = vmul.f32 %v126, %v136
    %v138 = vadd.f32 %v135, 1.0
    %v139 = vrcp.pop %v138
    %v140 = vmul.f32 %v138, %v139
    %v141 = vsub.f32 2.0, %v140
    %v142 = vmul.f32 %v139, %v141
    %v143 = vmul.f32 %v137, %v142
    %v144 = vpack.c.bf16 %v143, %v143
    %v145 = vld [vmem:[%s3] sm:$0xf]
    %v146 = vld [vmem:[%s3 + $0x4] sm:$0xf]
    %v147 = vld [vmem:[%s3 + $0x8] sm:$0xf]
    %v148 = vld [vmem:[%s3 + $0xc] sm:$0xf]
    %v149 = vld [vmem:[%s3 + $0x10] sm:$0xf]
    %v150 = vld [vmem:[%s3 + $0x14] sm:$0xf]
    %v151 = vld [vmem:[%s3 + $0x18] sm:$0xf]
    %v152 = vld [vmem:[%s3 + $0x1c] sm:$0xf]
    %v153 = vld [vmem:[%s3 + $0x20] sm:$0xf]
    %v154 = vld [vmem:[%s3 + $0x24] sm:$0xf]
    %v155 = vld [vmem:[%s3 + $0x28] sm:$0xf]
    %v156 = vld [vmem:[%s3 + $0x2c] sm:$0xf]
    %v157 = vld [vmem:[%s3 + $0x30] sm:$0xf]
    %v158 = vld [vmem:[%s3 + $0x34] sm:$0xf]
    %v159 = vld [vmem:[%s3 + $0x38] sm:$0xf]
    %v160 = vld [vmem:[%s3 + $0x3c] sm:$0xf]
    %v161 = vld [vmem:[#allocation5] sm:$0x1]
    %v163 = vlaneseq
    %v164 = vshrl.u32 %v163, 7
    %v165 = vsub.s32 0, %v164
    %v166 = vrot.slane %v161, %v165
    %v184 = vunpack.c.l.b16 %v145
    %v185 = vunpack.c.l.b16 %v146
    %v186 = vunpack.c.l.b16 %v147
    %v187 = vunpack.c.l.b16 %v148
    %v188 = vunpack.c.l.b16 %v149
    %v189 = vunpack.c.l.b16 %v150
    %v190 = vunpack.c.l.b16 %v151
    %v191 = vunpack.c.l.b16 %v152
    %v192 = vunpack.c.l.b16 %v153
    %v193 = vunpack.c.l.b16 %v154
    %v194 = vunpack.c.l.b16 %v155
    %v195 = vunpack.c.l.b16 %v156
    %v196 = vunpack.c.l.b16 %v157
    %v197 = vunpack.c.l.b16 %v158
    %v198 = vunpack.c.l.b16 %v159
    %v199 = vunpack.c.l.b16 %v160
    %v200 = vpack.c.b16 %v185, %v184
    %v201 = vpack.c.b16 %v187, %v186
    %v202 = vpack.c.b16 %v189, %v188
    %v203 = vpack.c.b16 %v191, %v190
    %v204 = vpack.c.b16 %v193, %v192
    %v205 = vpack.c.b16 %v195, %v194
    %v206 = vpack.c.b16 %v197, %v196
    %v207 = vpack.c.b16 %v199, %v198
    %216 = vmatprep.subr.bf16.mxu0 0
    %217 = vmatpush1.bf16.msra.mxu0 %v207
    %218 = vmatprep.subr.bf16.mxu0 0
    %219 = vmatpush1.bf16.msra.mxu0 %v206
    %220 = vmatprep.subr.bf16.mxu0 0
    %221 = vmatpush1.bf16.msra.mxu0 %v205
    %222 = vmatprep.subr.bf16.mxu0 0
    %223 = vmatpush1.bf16.msra.mxu0 %v204
    %224 = vmatprep.subr.bf16.mxu0 0
    %225 = vmatpush1.bf16.msra.mxu0 %v203
    %226 = vmatprep.subr.bf16.mxu0 0
    %227 = vmatpush1.bf16.msra.mxu0 %v202
    %228 = vmatprep.subr.bf16.mxu0 0
    %229 = vmatpush1.bf16.msra.mxu0 %v201
    %230 = vmatprep.subr.bf16.mxu0 0
    %231 = vmatpush1.bf16.msra.mxu0 %v200
    %232 = vmatprep.subr.bf16.mxu0 0
    %233 = vmatpush2.bf16.msra.mxu0 0
    %234 = vmatprep.subr.bf16.mxu0 0
    %235 = vmatpush2.bf16.msra.mxu0 0
    %236 = vmatprep.subr.bf16.mxu0 0
    %237 = vmatpush2.bf16.msra.mxu0 0
    %238 = vmatprep.subr.bf16.mxu0 0
    %239 = vmatpush2.bf16.msra.mxu0 0
    %240 = vmatprep.subr.bf16.mxu0 0
    %241 = vmatpush2.bf16.msra.mxu0 0
    %242 = vmatprep.subr.bf16.mxu0 0
    %243 = vmatpush2.bf16.msra.mxu0 0
    %244 = vmatprep.subr.bf16.mxu0 0
    %245 = vmatpush2.bf16.msra.mxu0 0
    %246 = vmatprep.subr.bf16.mxu0 0
    %247 = vmatpush2.bf16.msra.mxu0 0
    %248 = vmatprep.mubr.bf16.mxu0 0
    %249 = vmatmul.mubr.bf16.gmra.mxu0 %v144
    %v250 = vpop.f32.mrf.mxu0
    %v251 = vadd.f32 %v166, %v250
    %v252 = vpop.f32.mrf.mxu0
    %v253 = vpop.f32.mrf.mxu0
    %v254 = vpop.f32.mrf.mxu0
    %255 = vdwg.mxu0
    %v256 = vmin.f32 %v251, 20.0
    %v257 = vmul.f32 %v256, 1.442695
    %v258 = vpow.pop %v257
    %v259 = vadd.f32 %v258, 1.0
    %v260 = vmul.f32 %v259, %v259
    %v261 = vsub.f32 %v260, 1.0
    %v262 = vmul.f32 %v251, %v261
    %v263 = vadd.f32 %v260, 1.0
    %v264 = vrcp.pop %v263
    %v265 = vmul.f32 %v263, %v264
    %v266 = vsub.f32 2.0, %v265
    %v267 = vmul.f32 %v264, %v266
    %v268 = vmul.f32 %v262, %v267
    %v269 = vpack.c.bf16 %v268, %v268
    %v270 = vld [vmem:[%s5] sm:$0xf]
    %v271 = vld [vmem:[%s5 + $0x4] sm:$0xf]
    %v272 = vld [vmem:[%s5 + $0x8] sm:$0xf]
    %v273 = vld [vmem:[%s5 + $0xc] sm:$0xf]
    %v274 = vld [vmem:[%s5 + $0x10] sm:$0xf]
    %v275 = vld [vmem:[%s5 + $0x14] sm:$0xf]
    %v276 = vld [vmem:[%s5 + $0x18] sm:$0xf]
    %v277 = vld [vmem:[%s5 + $0x1c] sm:$0xf]
    %v278 = vld [vmem:[%s5 + $0x20] sm:$0xf]
    %v279 = vld [vmem:[%s5 + $0x24] sm:$0xf]
    %v280 = vld [vmem:[%s5 + $0x28] sm:$0xf]
    %v281 = vld [vmem:[%s5 + $0x2c] sm:$0xf]
    %v282 = vld [vmem:[%s5 + $0x30] sm:$0xf]
    %v283 = vld [vmem:[%s5 + $0x34] sm:$0xf]
    %v284 = vld [vmem:[%s5 + $0x38] sm:$0xf]
    %v285 = vld [vmem:[%s5 + $0x3c] sm:$0xf]
    %v286 = vld [vmem:[%s6] sm:$0x1]
    %v288 = vlaneseq
    %v289 = vshrl.u32 %v288, 7
    %v290 = vsub.s32 0, %v289
    %v291 = vrot.slane %v286, %v290
    %v309 = vunpack.c.l.b16 %v270
    %v310 = vunpack.c.l.b16 %v271
    %v311 = vunpack.c.l.b16 %v272
    %v312 = vunpack.c.l.b16 %v273
    %v313 = vunpack.c.l.b16 %v274
    %v314 = vunpack.c.l.b16 %v275
    %v315 = vunpack.c.l.b16 %v276
    %v316 = vunpack.c.l.b16 %v277
    %v317 = vunpack.c.l.b16 %v278
    %v318 = vunpack.c.l.b16 %v279
    %v319 = vunpack.c.l.b16 %v280
    %v320 = vunpack.c.l.b16 %v281
    %v321 = vunpack.c.l.b16 %v282
    %v322 = vunpack.c.l.b16 %v283
    %v323 = vunpack.c.l.b16 %v284
    %v324 = vunpack.c.l.b16 %v285
    %v325 = vpack.c.b16 %v310, %v309
    %v326 = vpack.c.b16 %v312, %v311
    %v327 = vpack.c.b16 %v314, %v313
    %v328 = vpack.c.b16 %v316, %v315
    %v329 = vpack.c.b16 %v318, %v317
    %v330 = vpack.c.b16 %v320, %v319
    %v331 = vpack.c.b16 %v322, %v321
    %v332 = vpack.c.b16 %v324, %v323
    %341 = vmatprep.subr.bf16.mxu0 0
    %342 = vmatpush1.bf16.msra.mxu0 %v332
    %343 = vmatprep.subr.bf16.mxu0 0
    %344 = vmatpush1.bf16.msra.mxu0 %v331
    %345 = vmatprep.subr.bf16.mxu0 0
    %346 = vmatpush1.bf16.msra.mxu0 %v330
    %347 = vmatprep.subr.bf16.mxu0 0
    %348 = vmatpush1.bf16.msra.mxu0 %v329
    %349 = vmatprep.subr.bf16.mxu0 0
    %350 = vmatpush1.bf16.msra.mxu0 %v328
    %351 = vmatprep.subr.bf16.mxu0 0
    %352 = vmatpush1.bf16.msra.mxu0 %v327
    %353 = vmatprep.subr.bf16.mxu0 0
    %354 = vmatpush1.bf16.msra.mxu0 %v326
    %355 = vmatprep.subr.bf16.mxu0 0
    %356 = vmatpush1.bf16.msra.mxu0 %v325
    %357 = vmatprep.subr.bf16.mxu0 0
    %358 = vmatpush2.bf16.msra.mxu0 0
    %359 = vmatprep.subr.bf16.mxu0 0
    %360 = vmatpush2.bf16.msra.mxu0 0
    %361 = vmatprep.subr.bf16.mxu0 0
    %362 = vmatpush2.bf16.msra.mxu0 0
    %363 = vmatprep.subr.bf16.mxu0 0
    %364 = vmatpush2.bf16.msra.mxu0 0
    %365 = vmatprep.subr.bf16.mxu0 0
    %366 = vmatpush2.bf16.msra.mxu0 0
    %367 = vmatprep.subr.bf16.mxu0 0
    %368 = vmatpush2.bf16.msra.mxu0 0
    %369 = vmatprep.subr.bf16.mxu0 0
    %370 = vmatpush2.bf16.msra.mxu0 0
    %371 = vmatprep.subr.bf16.mxu0 0
    %372 = vmatpush2.bf16.msra.mxu0 0
    %373 = vmatprep.mubr.bf16.mxu0 0
    %374 = vmatmul.mubr.bf16.gmra.mxu0 %v269
    %v375 = vpop.f32.mrf.mxu0
    %v376 = vadd.f32 %v291, %v375
    %v377 = vpop.f32.mrf.mxu0
    %v378 = vpop.f32.mrf.mxu0
    %v379 = vpop.f32.mrf.mxu0
    %380 = vdwg.mxu0
    %v381 = vmin.f32 %v376, 20.0
    %v382 = vmul.f32 %v381, 1.442695
    %v383 = vpow.pop %v382
    %v384 = vadd.f32 %v383, 1.0
    %v385 = vmul.f32 %v384, %v384
    %v386 = vsub.f32 %v385, 1.0
    %v387 = vmul.f32 %v376, %v386
    %v388 = vadd.f32 %v385, 1.0
    %v389 = vrcp.pop %v388
    %v390 = vmul.f32 %v388, %v389
    %v391 = vsub.f32 2.0, %v390
    %v392 = vmul.f32 %v389, %v391
    %v393 = vmul.f32 %v387, %v392
    %vm394 = vcmask 80896
    %v395 = vsel %vm394, %v393, -inf
    %396 = vmax.xlane.f32.xlu0 %v395
    %v397 = vpop.xlane.xlu0 %396
    %v398 = vsub.f32 %v393, %v397
    %v399 = vmul.f32 %v398, 1.442695
    %v400 = vpow.pop %v399
    %v401 = vsel %vm394, %v400, 0.0
    %402 = vadd.xlane.f32.xlu0 %v401
    %v403 = vpop.xlane.xlu0 %402
    %v404 = vrcp.pop %v403
    %v405 = vmul.f32 %v403, %v404
    %v406 = vsub.f32 2.0, %v405
    %v407 = vmul.f32 %v404, %v406
    %v408 = vmul.f32 %v400, %v407
    %409 = vst.msk [vmem:[#allocation7] sm:$0xff] %vm394, %v408
    // Predicated region
    $region38: #{tpu_custom_call.1} parent=1 // pred_check
      _
    $region39: #{tpu_custom_call.1} parent=1 // pred_check_branch
      %411 = sbr.rel (0) target = $region41
    $region40: #{tpu_custom_call.1} parent=1 // pred_region
      %s413 = ssub.s32 128, 128
      %414 = vsyncadd [#allocation4], %s413
      %s416 = sshll.u32 [#allocation7], 4
      %s417 = int_to_ptr.vmem [resolvable:$true] %s416
      %419 = dma.vmem_to_hbm [thread:$0]  %s417, 128, %s7, [#allocation4]
    $region41: #{tpu_custom_call.1} parent=1 // pred_fallthru
      _
    // Predicated region
    $region42: #{tpu_custom_call.1} parent=1 // pred_check
      _
    $region43: #{tpu_custom_call.1} parent=1 // pred_check_branch
      %421 = sbr.rel (0) target = $region45
    $region44: #{tpu_custom_call.1} parent=1 // pred_region
      %422 = dma.done [#allocation4], 128
    $region45: #{tpu_custom_call.1} parent=1 // pred_fallthru
      _
    %423 = vsyncpa [#allocation3], 1
    %424 = vsyncpa [#allocation6], 1
    %425 = vsyncpa [#allocation4], 1

</llo_original>
